<compile_context>
chip_gen: v7x
topology: tpu7x:2x2x1
jax: 0.10.0
libtpu: 0.0.40
codegen_flags: <defaults>
</compile_context>

<pallas_src>
import jax
import jax.numpy as jnp
from jax.experimental import pallas as pl
from jax.experimental.pallas import tpu as pltpu

VOCAB = 26
EMB = 5
HIDDEN = 10
CLASSES = 6


def rnn_fc_kernel(tok_ref, embp_ref, whh_ref, wlin_ref, blin_ref, o_ref):
    """tok:  (T*B, 1) i32, t-major (row t*B + b holds tokens[b, t])
    embp: (V, H) f32  == emb_table @ weight_ih_l0.T   (folded at init)
    whh:  (H, H) f32  == weight_hh_l0.T
    wlin: (H, C) f32  == linear.weight.T
    blin: (1, C) f32
    o:    (B, C) f32

    h_t = tanh(emb[tok_t] @ W_ih + h_{t-1} @ W_hh)   (nn.RNN(5, 10, bias=False))
    o   = relu(h_T) @ W_lin + b_lin                  (fc = Sequential(ReLU, Linear))
    """
    B = o_ref.shape[0]
    TB = tok_ref.shape[0]
    T = TB // B
    V, H = embp_ref.shape

    # ---- Off-critical-path work --------------------------------------------
    # One fused one-hot + ONE matmul for all per-step projected inputs.
    # (Out-of-range token ids yield an all-zero one-hot -> zero embedding.)
    lane_iota = jax.lax.broadcasted_iota(jnp.int32, (TB, V), 1)      # (T*B, V)
    onehot = (lane_iota == tok_ref[...]).astype(jnp.float32)         # (T*B, V)
    xp_all = jnp.dot(onehot, embp_ref[...],
                     preferred_element_type=jnp.float32)             # (T*B, H)
    xp = [xp_all[t * B:(t + 1) * B, :] for t in range(T)]            # (B, H) each

    # ---- Serial recurrence (the only real dependency chain) ----------------
    # f32 operands throughout; static unroll so the LLO scheduler sees it all.
    whh = whh_ref[...]                                               # (H, H)
    h = jnp.tanh(xp[0])                      # h_0 == 0 -> skip first matmul
    for t in range(1, T):                                            # static unroll
        h = jnp.tanh(xp[t] + jnp.dot(h, whh,
                                     preferred_element_type=jnp.float32))

    # fc = Sequential(ReLU, Linear) applied to the final hidden state.
    o_ref[...] = (jnp.dot(jnp.maximum(h, 0.0), wlin_ref[...],
                          preferred_element_type=jnp.float32)
                  + blin_ref[...])


def prepare_params(params):
    """One-time, init-time fold of the RNN input projection into the embedding
    table: emb_proj = emb_table @ W_ih  (26 x 10).  Weights are static at
    inference, so this removes one MXU op and one input DMA from every call."""
    emb_table, w_ih, w_hh, w_lin, b_lin = params
    emb_proj = jnp.dot(emb_table.astype(jnp.float32), w_ih.astype(jnp.float32))
    return (emb_proj,
            w_hh.astype(jnp.float32),
            w_lin.astype(jnp.float32),
            b_lin.reshape(1, CLASSES).astype(jnp.float32))


@jax.jit
def model_forward(tokens, prepared):
    """tokens: (B, T) int32 in [0, VOCAB). Returns logits (B, CLASSES) f32."""
    emb_proj, w_hh, w_lin, b_lin = prepared
    B, T = tokens.shape

    # Tiny (64-byte) layout shuffle so the kernel builds the whole (T*B, V)
    # one-hot with a single iota + compare; t-major so step t is a contiguous
    # B-row sublane slice.
    tok_col = jnp.transpose(tokens.astype(jnp.int32)).reshape(T * B, 1)

    vmem = pl.BlockSpec(memory_space=pltpu.MemorySpace.VMEM)

    flops = (2 * T * B * VOCAB * HIDDEN            # fused one-hot @ emb_proj
             + 2 * (T - 1) * B * HIDDEN * HIDDEN   # recurrence
             + 2 * B * HIDDEN * CLASSES)           # fc
    bytes_accessed = 4 * (T * B + VOCAB * HIDDEN + HIDDEN * HIDDEN
                          + HIDDEN * CLASSES + CLASSES + B * CLASSES)

    # TODO(synk): nn.CrossEntropyLoss branch (y is not None) not implemented;
    # only the inference path (y=None) is reproduced.  (nn.AvgPool1d is defined
    # in the module but never used in forward.)
    y_pred = pl.pallas_call(
        rnn_fc_kernel,
        out_shape=jax.ShapeDtypeStruct((B, CLASSES), jnp.float32),
        in_specs=[vmem] * 5,
        out_specs=vmem,
        cost_estimate=pl.CostEstimate(flops=flops,
                                      transcendentals=T * B * HIDDEN,
                                      bytes_accessed=bytes_accessed),
    )(tok_col, emb_proj, w_hh, w_lin, b_lin)
    # torch.squeeze on (1, B, C) -> (B, C); already (B, C) here.
    return y_pred


def init_params(key):
    k1, k2, k3, k4, k5 = jax.random.split(key, 5)
    emb_table = jax.random.normal(k1, (VOCAB, EMB), jnp.float32)   # N(0,1) like nn.Embedding
    bound_rnn = 1.0 / jnp.sqrt(HIDDEN)
    w_ih = jax.random.uniform(k2, (EMB, HIDDEN), jnp.float32,
                              minval=-bound_rnn, maxval=bound_rnn)
    w_hh = jax.random.uniform(k3, (HIDDEN, HIDDEN), jnp.float32,
                              minval=-bound_rnn, maxval=bound_rnn)
    bound_lin = 1.0 / jnp.sqrt(HIDDEN)
    w_lin = jax.random.uniform(k4, (HIDDEN, CLASSES), jnp.float32,
                               minval=-bound_lin, maxval=bound_lin)
    b_lin = jax.random.uniform(k5, (CLASSES,), jnp.float32,
                               minval=-bound_lin, maxval=bound_lin)
    return emb_table, w_ih, w_hh, w_lin, b_lin


if __name__ == "__main__":
    key = jax.random.PRNGKey(0)
    pkey, xkey = jax.random.split(key)

    params = init_params(pkey)
    prepared = prepare_params(params)      # one-time weight fold (emb @ W_ih)

    B, T = 2, 8
    tokens = jax.random.randint(xkey, (B, T), 0, VOCAB, dtype=jnp.int32)

    y_pred = model_forward(tokens, prepared)
    y_pred = jax.block_until_ready(y_pred)

    assert y_pred.shape == (B, CLASSES)
    assert y_pred.dtype == jnp.float32
    assert bool(jnp.all(jnp.isfinite(y_pred)))
    print("KERNEL_OK")
</pallas_src>

<mosaic_0001>
module attributes {stable_mosaic.version = 11 : i64} {
  func.func @rnn_fc_kernel(%arg0: memref<16x1xi32, #tpu.memory_space<vmem>>, %arg1: memref<26x10xf32, #tpu.memory_space<vmem>>, %arg2: memref<10x10xf32, #tpu.memory_space<vmem>>, %arg3: memref<10x6xf32, #tpu.memory_space<vmem>>, %arg4: memref<1x6xf32, #tpu.memory_space<vmem>>, %arg5: memref<2x6xf32, #tpu.memory_space<vmem>>) attributes {dimension_semantics = [], scalar_prefetch = 0 : i64, scratch_operands = 0 : i64, tpu.core_type = #tpu.core_type<tc>} {
    %0 = tpu.iota {dimensions = array<i32: 1>} : vector<16x26xi32>
    %c0 = arith.constant 0 : index
    %c0_0 = arith.constant 0 : index
    %1 = vector.load %arg0[%c0, %c0_0] : memref<16x1xi32, #tpu.memory_space<vmem>>, vector<16x1xi32>
    %2 = vector.broadcast %1 : vector<16x1xi32> to vector<16x26xi32>
    %3 = arith.cmpi eq, %0, %2 : vector<16x26xi32>
    %4 = arith.extui %3 : vector<16x26xi1> to vector<16x26xi32>
    %5 = arith.sitofp %4 : vector<16x26xi32> to vector<16x26xf32>
    %c0_1 = arith.constant 0 : index
    %c0_2 = arith.constant 0 : index
    %6 = vector.load %arg1[%c0_1, %c0_2] : memref<26x10xf32, #tpu.memory_space<vmem>>, vector<26x10xf32>
    %cst = arith.constant dense<0.000000e+00> : vector<16x10xf32>
    %7 = tpu.matmul %5, %6, %cst {dimension_numbers = #tpu.dot_dimension_numbers<[1], [0], [0], [1], [0, 0, 1, 1], [], []>} : vector<16x26xf32>, vector<26x10xf32>, vector<16x10xf32> -> vector<16x10xf32>
    %8 = vector.extract_strided_slice %7 {offsets = [0, 0], sizes = [2, 10], strides = [1, 1]} : vector<16x10xf32> to vector<2x10xf32>
    %9 = vector.extract_strided_slice %7 {offsets = [2, 0], sizes = [2, 10], strides = [1, 1]} : vector<16x10xf32> to vector<2x10xf32>
    %10 = vector.extract_strided_slice %7 {offsets = [4, 0], sizes = [2, 10], strides = [1, 1]} : vector<16x10xf32> to vector<2x10xf32>
    %11 = vector.extract_strided_slice %7 {offsets = [6, 0], sizes = [2, 10], strides = [1, 1]} : vector<16x10xf32> to vector<2x10xf32>
    %12 = vector.extract_strided_slice %7 {offsets = [8, 0], sizes = [2, 10], strides = [1, 1]} : vector<16x10xf32> to vector<2x10xf32>
    %13 = vector.extract_strided_slice %7 {offsets = [10, 0], sizes = [2, 10], strides = [1, 1]} : vector<16x10xf32> to vector<2x10xf32>
    %14 = vector.extract_strided_slice %7 {offsets = [12, 0], sizes = [2, 10], strides = [1, 1]} : vector<16x10xf32> to vector<2x10xf32>
    %15 = vector.extract_strided_slice %7 {offsets = [14, 0], sizes = [2, 10], strides = [1, 1]} : vector<16x10xf32> to vector<2x10xf32>
    %c0_3 = arith.constant 0 : index
    %c0_4 = arith.constant 0 : index
    %16 = vector.load %arg2[%c0_3, %c0_4] : memref<10x10xf32, #tpu.memory_space<vmem>>, vector<10x10xf32>
    %17 = math.tanh %8 : vector<2x10xf32>
    %cst_5 = arith.constant dense<0.000000e+00> : vector<2x10xf32>
    %18 = tpu.matmul %17, %16, %cst_5 {dimension_numbers = #tpu.dot_dimension_numbers<[1], [0], [0], [1], [0, 0, 1, 1], [], []>} : vector<2x10xf32>, vector<10x10xf32>, vector<2x10xf32> -> vector<2x10xf32>
    %19 = arith.addf %9, %18 : vector<2x10xf32>
    %20 = math.tanh %19 : vector<2x10xf32>
    %cst_6 = arith.constant dense<0.000000e+00> : vector<2x10xf32>
    %21 = tpu.matmul %20, %16, %cst_6 {dimension_numbers = #tpu.dot_dimension_numbers<[1], [0], [0], [1], [0, 0, 1, 1], [], []>} : vector<2x10xf32>, vector<10x10xf32>, vector<2x10xf32> -> vector<2x10xf32>
    %22 = arith.addf %10, %21 : vector<2x10xf32>
    %23 = math.tanh %22 : vector<2x10xf32>
    %cst_7 = arith.constant dense<0.000000e+00> : vector<2x10xf32>
    %24 = tpu.matmul %23, %16, %cst_7 {dimension_numbers = #tpu.dot_dimension_numbers<[1], [0], [0], [1], [0, 0, 1, 1], [], []>} : vector<2x10xf32>, vector<10x10xf32>, vector<2x10xf32> -> vector<2x10xf32>
    %25 = arith.addf %11, %24 : vector<2x10xf32>
    %26 = math.tanh %25 : vector<2x10xf32>
    %cst_8 = arith.constant dense<0.000000e+00> : vector<2x10xf32>
    %27 = tpu.matmul %26, %16, %cst_8 {dimension_numbers = #tpu.dot_dimension_numbers<[1], [0], [0], [1], [0, 0, 1, 1], [], []>} : vector<2x10xf32>, vector<10x10xf32>, vector<2x10xf32> -> vector<2x10xf32>
    %28 = arith.addf %12, %27 : vector<2x10xf32>
    %29 = math.tanh %28 : vector<2x10xf32>
    %cst_9 = arith.constant dense<0.000000e+00> : vector<2x10xf32>
    %30 = tpu.matmul %29, %16, %cst_9 {dimension_numbers = #tpu.dot_dimension_numbers<[1], [0], [0], [1], [0, 0, 1, 1], [], []>} : vector<2x10xf32>, vector<10x10xf32>, vector<2x10xf32> -> vector<2x10xf32>
    %31 = arith.addf %13, %30 : vector<2x10xf32>
    %32 = math.tanh %31 : vector<2x10xf32>
    %cst_10 = arith.constant dense<0.000000e+00> : vector<2x10xf32>
    %33 = tpu.matmul %32, %16, %cst_10 {dimension_numbers = #tpu.dot_dimension_numbers<[1], [0], [0], [1], [0, 0, 1, 1], [], []>} : vector<2x10xf32>, vector<10x10xf32>, vector<2x10xf32> -> vector<2x10xf32>
    %34 = arith.addf %14, %33 : vector<2x10xf32>
    %35 = math.tanh %34 : vector<2x10xf32>
    %cst_11 = arith.constant dense<0.000000e+00> : vector<2x10xf32>
    %36 = tpu.matmul %35, %16, %cst_11 {dimension_numbers = #tpu.dot_dimension_numbers<[1], [0], [0], [1], [0, 0, 1, 1], [], []>} : vector<2x10xf32>, vector<10x10xf32>, vector<2x10xf32> -> vector<2x10xf32>
    %37 = arith.addf %15, %36 : vector<2x10xf32>
    %38 = math.tanh %37 : vector<2x10xf32>
    %cst_12 = arith.constant 0.000000e+00 : f32
    %39 = vector.broadcast %cst_12 : f32 to vector<2x10xf32>
    %40 = arith.maximumf %38, %39 : vector<2x10xf32>
    %c0_13 = arith.constant 0 : index
    %c0_14 = arith.constant 0 : index
    %41 = vector.load %arg3[%c0_13, %c0_14] : memref<10x6xf32, #tpu.memory_space<vmem>>, vector<10x6xf32>
    %cst_15 = arith.constant dense<0.000000e+00> : vector<2x6xf32>
    %42 = tpu.matmul %40, %41, %cst_15 {dimension_numbers = #tpu.dot_dimension_numbers<[1], [0], [0], [1], [0, 0, 1, 1], [], []>} : vector<2x10xf32>, vector<10x6xf32>, vector<2x6xf32> -> vector<2x6xf32>
    %c0_16 = arith.constant 0 : index
    %c0_17 = arith.constant 0 : index
    %43 = vector.load %arg4[%c0_16, %c0_17] : memref<1x6xf32, #tpu.memory_space<vmem>>, vector<1x6xf32>
    %44 = vector.broadcast %43 : vector<1x6xf32> to vector<2x6xf32>
    %45 = arith.addf %42, %44 : vector<2x6xf32>
    %c0_18 = arith.constant 0 : index
    %c0_19 = arith.constant 0 : index
    %46 = vector.load %arg5[%c0_18, %c0_19] : memref<2x6xf32, #tpu.memory_space<vmem>>, vector<2x6xf32>
    tpu.vector_store %arg5[%c0_18, %c0_19], %45 {strides = array<i32>} : memref<2x6xf32, #tpu.memory_space<vmem>>, vector<2x6xf32>,
    return
  }
}

</mosaic_0001>

<llo_original>
// kernel: model_forward.1
$region0: #{model_forward.1}
  #allocation0 [shape = 'u32[]', space=smem, size = 0x4, offset = 0x4, fixed_abs, tag = 'smem constant byte address 0x4 - core index']
  #allocation1 [shape = 'u32[144,128]{1,0:T(1,128)}', space=vmem, size = 0x12000, scoped, tag = 'internal scratch']
  %s0 = inlined_call_operand.vmem [shape: s32[16,1], index: 0, kind: input, shape index: {}]
  %s1 = inlined_call_operand.vmem [shape: f32[26,10], index: 1, kind: input, shape index: {}]
  %s2 = inlined_call_operand.vmem [shape: f32[10,10], index: 2, kind: input, shape index: {}]
  %s3 = inlined_call_operand.vmem [shape: f32[10,6], index: 3, kind: input, shape index: {}]
  %s4 = inlined_call_operand.vmem [shape: f32[1,6], index: 4, kind: input, shape index: {}]
  %s5 = inlined_call_operand.hbm [shape: f32[2,6], index: 5, kind: output, shape index: {}]
  %s6 = sld [smem:[#allocation0]]
  $region30: #{model_forward.1} parent=0
    _
  %s8 = ssub.s32 1, %s6
  %s9 = scalar_select 0, %s8, %s6
  $region1: #{model_forward.1} parent=0
    #allocation2 [shape = 'u8[1024]{0}', space=vmem, size = 0x400, scoped, tag = 'output window, operand 0, single buffered']
    #allocation3 [shape = 's32[1]{0}', space=sflag, size = 0x4, scoped, tag = 'scoped memory for model_forward.1']
    %10 = vsyncpa [#allocation3], 0
    // Predicated region
    $region2: #{model_forward.1} parent=1 // pred_check
      _
    $region3: #{model_forward.1} parent=1 // pred_check_branch
      %12 = sbr.rel (0) target = $region5
    $region4: #{model_forward.1} parent=1 // pred_region
      _
    $region5: #{model_forward.1} parent=1 // pred_fallthru
      _
    // Predicated region
    $region6: #{model_forward.1} parent=1 // pred_check
      _
    $region7: #{model_forward.1} parent=1 // pred_check_branch
      %14 = sbr.rel (0) target = $region9
    $region8: #{model_forward.1} parent=1 // pred_region
      _
    $region9: #{model_forward.1} parent=1 // pred_fallthru
      _
    // Predicated region
    $region10: #{model_forward.1} parent=1 // pred_check
      _
    $region11: #{model_forward.1} parent=1 // pred_check_branch
      %16 = sbr.rel (0) target = $region13
    $region12: #{model_forward.1} parent=1 // pred_region
      _
    $region13: #{model_forward.1} parent=1 // pred_fallthru
      _
    // Predicated region
    $region14: #{model_forward.1} parent=1 // pred_check
      _
    $region15: #{model_forward.1} parent=1 // pred_check_branch
      %18 = sbr.rel (0) target = $region17
    $region16: #{model_forward.1} parent=1 // pred_region
      _
    $region17: #{model_forward.1} parent=1 // pred_fallthru
      _
    // Predicated region
    $region18: #{model_forward.1} parent=1 // pred_check
      _
    $region19: #{model_forward.1} parent=1 // pred_check_branch
      %20 = sbr.rel (0) target = $region21
    $region20: #{model_forward.1} parent=1 // pred_region
      _
    $region21: #{model_forward.1} parent=1 // pred_fallthru
      _
    %v21 = vlaneseq
    %v22 = vand.u32 %v21, 127
    %v23 = vld [vmem:[%s0] sm:$0xff]
    %v24 = vld [vmem:[%s0 + $0x8] sm:$0xff]
    %25 = vset.pattern.permute.xlu0 0
    %26 = vperm.xlu0 %25, %v23
    %v27 = vpop.permute.xlu0 %26
    %28 = vset.pattern.permute.xlu0 0
    %29 = vperm.xlu0 %28, %v24
    %v30 = vpop.permute.xlu0 %29
    %vm31 = vcmp.eq.s32.totalorder %v22, %v27
    %vm32 = vcmp.eq.s32.totalorder %v22, %v30
    %v33 = vsel %vm31, 1, 0
    %v34 = vsel %vm32, 1, 0
    %v35 = vcvt.s32.f32 %v33
    %v36 = vcvt.s32.f32 %v34
    %v37 = vld [vmem:[%s1] sm:$0xff]
    %v38 = vld [vmem:[%s1 + $0x8] sm:$0xff]
    %v39 = vld [vmem:[%s1 + $0x10] sm:$0xff]
    %v40 = vld [vmem:[%s1 + $0x18] sm:$0x3]
    %vm41 = vcmask 211968
    %v43 = vsel %vm41, %v35, 0
    %v46 = vsel %vm41, %v36, 0
    %vm48 = vcmask 1041408
    %v50 = vsel %vm48, %v40, 0
    %52 = vmatprep.subr.mxu0 0.0
    %53 = vmatpush1.msra.mxu0 %v37
    %54 = vmatprep.subr.mxu0 0.0
    %55 = vmatpush1.msra.mxu0 %v38
    %56 = vmatprep.subr.mxu0 0.0
    %57 = vmatpush1.msra.mxu0 %v39
    %58 = vmatprep.subr.mxu0 0.0
    %59 = vmatpush1.msra.mxu0 %v50
    %60 = vmatprep.subr.mxu0 0.0
    %61 = vmatpush1.msra.mxu0 0.0
    %62 = vmatprep.subr.mxu0 0.0
    %63 = vmatpush1.msra.mxu0 0.0
    %64 = vmatprep.subr.mxu0 0.0
    %65 = vmatpush1.msra.mxu0 0.0
    %66 = vmatprep.subr.mxu0 0.0
    %67 = vmatpush1.msra.mxu0 0.0
    %68 = vmatprep.subr.mxu0 0.0
    %69 = vmatpush1.msra.mxu0 0.0
    %70 = vmatprep.subr.mxu0 0.0
    %71 = vmatpush1.msra.mxu0 0.0
    %72 = vmatprep.subr.mxu0 0.0
    %73 = vmatpush1.msra.mxu0 0.0
    %74 = vmatprep.subr.mxu0 0.0
    %75 = vmatpush1.msra.mxu0 0.0
    %76 = vmatprep.subr.mxu0 0.0
    %77 = vmatpush1.msra.mxu0 0.0
    %78 = vmatprep.subr.mxu0 0.0
    %79 = vmatpush1.msra.mxu0 0.0
    %80 = vmatprep.subr.mxu0 0.0
    %81 = vmatpush1.msra.mxu0 0.0
    %82 = vmatprep.subr.mxu0 0.0
    %83 = vmatpush1.msra.mxu0 0.0
    %84 = vmatprep.subr.mxu0 0.0
    %85 = vmatpush1.msra.mxu0 0.0
    %86 = vmatprep.subr.mxu0 0.0
    %87 = vmatpush1.msra.mxu0 0.0
    %88 = vmatprep.subr.mxu0 0.0
    %89 = vmatpush1.msra.mxu0 0.0
    %90 = vmatprep.subr.mxu0 0.0
    %91 = vmatpush1.msra.mxu0 0.0
    %92 = vmatprep.subr.mxu0 0.0
    %93 = vmatpush1.msra.mxu0 0.0
    %94 = vmatprep.subr.mxu0 0.0
    %95 = vmatpush1.msra.mxu0 0.0
    %96 = vmatprep.subr.mxu0 0.0
    %97 = vmatpush1.msra.mxu0 0.0
    %98 = vmatprep.subr.mxu0 0.0
    %99 = vmatpush1.msra.mxu0 0.0
    %100 = vmatprep.subr.mxu0 0.0
    %101 = vmatpush1.msra.mxu0 0.0
    %102 = vmatprep.subr.mxu0 0.0
    %103 = vmatpush1.msra.mxu0 0.0
    %104 = vmatprep.subr.mxu0 0.0
    %105 = vmatpush1.msra.mxu0 0.0
    %106 = vmatprep.subr.mxu0 0.0
    %107 = vmatpush1.msra.mxu0 0.0
    %108 = vmatprep.subr.mxu0 0.0
    %109 = vmatpush1.msra.mxu0 0.0
    %110 = vmatprep.subr.mxu0 0.0
    %111 = vmatpush1.msra.mxu0 0.0
    %112 = vmatprep.subr.mxu0 0.0
    %113 = vmatpush1.msra.mxu0 0.0
    %114 = vmatprep.subr.mxu0 0.0
    %115 = vmatpush1.msra.mxu0 0.0
    %116 = vmatprep.mubr.f32.mxu0 0.0
    %117 = vmatmul.mubr.f32.gmra.mrb[0].mxu0 %v43
    %v118 = vpop.f32.mrb[0].mxu0
    %v119 = vadd.f32 0.0, %v118
    %v120 = vpop.f32.mrb[0].mxu0
    %121 = vmatprep.mubr.f32.mxu0 0.0
    %122 = vmatmul.mubr.f32.gmra.mrb[0].mxu0 %v46
    %v123 = vpop.f32.mrb[0].mxu0
    %v124 = vadd.f32 0.0, %v123
    %v125 = vpop.f32.mrb[0].mxu0
    %126 = vdwg.mxu0
    %v127 = vld [vmem:[%s2] sm:$0xff]
    %v128 = vld [vmem:[%s2 + $0x8] sm:$0x3]
    %v129 = vtanh.pop %v119
    %vm130 = vcmask 80896
    %v132 = vsel %vm130, %v129, 0
    %v135 = vsel %vm48, %v128, 0
    %137 = vmatprep.subr.mxu0 0.0
    %138 = vmatpush1.msra.mxu0 %v127
    %139 = vmatprep.subr.mxu0 0.0
    %140 = vmatpush1.msra.mxu0 %v135
    %141 = vmatprep.subr.mxu0 0.0
    %142 = vmatpush1.msra.mxu0 0.0
    %143 = vmatprep.subr.mxu0 0.0
    %144 = vmatpush1.msra.mxu0 0.0
    %145 = vmatprep.subr.mxu0 0.0
    %146 = vmatpush1.msra.mxu0 0.0
    %147 = vmatprep.subr.mxu0 0.0
    %148 = vmatpush1.msra.mxu0 0.0
    %149 = vmatprep.subr.mxu0 0.0
    %150 = vmatpush1.msra.mxu0 0.0
    %151 = vmatprep.subr.mxu0 0.0
    %152 = vmatpush1.msra.mxu0 0.0
    %153 = vmatprep.subr.mxu0 0.0
    %154 = vmatpush1.msra.mxu0 0.0
    %155 = vmatprep.subr.mxu0 0.0
    %156 = vmatpush1.msra.mxu0 0.0
    %157 = vmatprep.subr.mxu0 0.0
    %158 = vmatpush1.msra.mxu0 0.0
    %159 = vmatprep.subr.mxu0 0.0
    %160 = vmatpush1.msra.mxu0 0.0
    %161 = vmatprep.subr.mxu0 0.0
    %162 = vmatpush1.msra.mxu0 0.0
    %163 = vmatprep.subr.mxu0 0.0
    %164 = vmatpush1.msra.mxu0 0.0
    %165 = vmatprep.subr.mxu0 0.0
    %166 = vmatpush1.msra.mxu0 0.0
    %167 = vmatprep.subr.mxu0 0.0
    %168 = vmatpush1.msra.mxu0 0.0
    %169 = vmatprep.subr.mxu0 0.0
    %170 = vmatpush1.msra.mxu0 0.0
    %171 = vmatprep.subr.mxu0 0.0
    %172 = vmatpush1.msra.mxu0 0.0
    %173 = vmatprep.subr.mxu0 0.0
    %174 = vmatpush1.msra.mxu0 0.0
    %175 = vmatprep.subr.mxu0 0.0
    %176 = vmatpush1.msra.mxu0 0.0
    %177 = vmatprep.subr.mxu0 0.0
    %178 = vmatpush1.msra.mxu0 0.0
    %179 = vmatprep.subr.mxu0 0.0
    %180 = vmatpush1.msra.mxu0 0.0
    %181 = vmatprep.subr.mxu0 0.0
    %182 = vmatpush1.msra.mxu0 0.0
    %183 = vmatprep.subr.mxu0 0.0
    %184 = vmatpush1.msra.mxu0 0.0
    %185 = vmatprep.subr.mxu0 0.0
    %186 = vmatpush1.msra.mxu0 0.0
    %187 = vmatprep.subr.mxu0 0.0
    %188 = vmatpush1.msra.mxu0 0.0
    %189 = vmatprep.subr.mxu0 0.0
    %190 = vmatpush1.msra.mxu0 0.0
    %191 = vmatprep.subr.mxu0 0.0
    %192 = vmatpush1.msra.mxu0 0.0
    %193 = vmatprep.subr.mxu0 0.0
    %194 = vmatpush1.msra.mxu0 0.0
    %195 = vmatprep.subr.mxu0 0.0
    %196 = vmatpush1.msra.mxu0 0.0
    %197 = vmatprep.subr.mxu0 0.0
    %198 = vmatpush1.msra.mxu0 0.0
    %199 = vmatprep.subr.mxu0 0.0
    %200 = vmatpush1.msra.mxu0 0.0
    %201 = vmatprep.mubr.f32.mxu0 0.0
    %202 = vmatmul.mubr.f32.gmra.mrb[0].mxu0 %v132
    %v203 = vpop.f32.mrb[0].mxu0
    %v204 = vadd.f32 0.0, %v203
    %v205 = vpop.f32.mrb[0].mxu0
    %206 = vdwg.mxu0
    %v208 = vrot.slane %v204, 6
    %v210 = vadd.f32 %v119, %v208
    %v211 = vtanh.pop %v210
    %v213 = vrot.slane %v211, 2
    %v214 = vsel %vm130, %v213, 0
    %216 = vmatprep.subr.mxu0 0.0
    %217 = vmatpush1.msra.mxu0 %v127
    %218 = vmatprep.subr.mxu0 0.0
    %219 = vmatpush1.msra.mxu0 %v135
    %220 = vmatprep.subr.mxu0 0.0
    %221 = vmatpush1.msra.mxu0 0.0
    %222 = vmatprep.subr.mxu0 0.0
    %223 = vmatpush1.msra.mxu0 0.0
    %224 = vmatprep.subr.mxu0 0.0
    %225 = vmatpush1.msra.mxu0 0.0
    %226 = vmatprep.subr.mxu0 0.0
    %227 = vmatpush1.msra.mxu0 0.0
    %228 = vmatprep.subr.mxu0 0.0
    %229 = vmatpush1.msra.mxu0 0.0
    %230 = vmatprep.subr.mxu0 0.0
    %231 = vmatpush1.msra.mxu0 0.0
    %232 = vmatprep.subr.mxu0 0.0
    %233 = vmatpush1.msra.mxu0 0.0
    %234 = vmatprep.subr.mxu0 0.0
    %235 = vmatpush1.msra.mxu0 0.0
    %236 = vmatprep.subr.mxu0 0.0
    %237 = vmatpush1.msra.mxu0 0.0
    %238 = vmatprep.subr.mxu0 0.0
    %239 = vmatpush1.msra.mxu0 0.0
    %240 = vmatprep.subr.mxu0 0.0
    %241 = vmatpush1.msra.mxu0 0.0
    %242 = vmatprep.subr.mxu0 0.0
    %243 = vmatpush1.msra.mxu0 0.0
    %244 = vmatprep.subr.mxu0 0.0
    %245 = vmatpush1.msra.mxu0 0.0
    %246 = vmatprep.subr.mxu0 0.0
    %247 = vmatpush1.msra.mxu0 0.0
    %248 = vmatprep.subr.mxu0 0.0
    %249 = vmatpush1.msra.mxu0 0.0
    %250 = vmatprep.subr.mxu0 0.0
    %251 = vmatpush1.msra.mxu0 0.0
    %252 = vmatprep.subr.mxu0 0.0
    %253 = vmatpush1.msra.mxu0 0.0
    %254 = vmatprep.subr.mxu0 0.0
    %255 = vmatpush1.msra.mxu0 0.0
    %256 = vmatprep.subr.mxu0 0.0
    %257 = vmatpush1.msra.mxu0 0.0
    %258 = vmatprep.subr.mxu0 0.0
    %259 = vmatpush1.msra.mxu0 0.0
    %260 = vmatprep.subr.mxu0 0.0
    %261 = vmatpush1.msra.mxu0 0.0
    %262 = vmatprep.subr.mxu0 0.0
    %263 = vmatpush1.msra.mxu0 0.0
    %264 = vmatprep.subr.mxu0 0.0
    %265 = vmatpush1.msra.mxu0 0.0
    %266 = vmatprep.subr.mxu0 0.0
    %267 = vmatpush1.msra.mxu0 0.0
    %268 = vmatprep.subr.mxu0 0.0
    %269 = vmatpush1.msra.mxu0 0.0
    %270 = vmatprep.subr.mxu0 0.0
    %271 = vmatpush1.msra.mxu0 0.0
    %272 = vmatprep.subr.mxu0 0.0
    %273 = vmatpush1.msra.mxu0 0.0
    %274 = vmatprep.subr.mxu0 0.0
    %275 = vmatpush1.msra.mxu0 0.0
    %276 = vmatprep.subr.mxu0 0.0
    %277 = vmatpush1.msra.mxu0 0.0
    %278 = vmatprep.subr.mxu0 0.0
    %279 = vmatpush1.msra.mxu0 0.0
    %280 = vmatprep.mubr.f32.mxu0 0.0
    %281 = vmatmul.mubr.f32.gmra.mrb[0].mxu0 %v214
    %v282 = vpop.f32.mrb[0].mxu0
    %v283 = vadd.f32 0.0, %v282
    %v284 = vpop.f32.mrb[0].mxu0
    %285 = vdwg.mxu0
    %v287 = vrot.slane %v283, 4
    %v289 = vadd.f32 %v119, %v287
    %v290 = vtanh.pop %v289
    %v292 = vrot.slane %v290, 4
    %v293 = vsel %vm130, %v292, 0
    %295 = vmatprep.subr.mxu0 0.0
    %296 = vmatpush1.msra.mxu0 %v127
    %297 = vmatprep.subr.mxu0 0.0
    %298 = vmatpush1.msra.mxu0 %v135
    %299 = vmatprep.subr.mxu0 0.0
    %300 = vmatpush1.msra.mxu0 0.0
    %301 = vmatprep.subr.mxu0 0.0
    %302 = vmatpush1.msra.mxu0 0.0
    %303 = vmatprep.subr.mxu0 0.0
    %304 = vmatpush1.msra.mxu0 0.0
    %305 = vmatprep.subr.mxu0 0.0
    %306 = vmatpush1.msra.mxu0 0.0
    %307 = vmatprep.subr.mxu0 0.0
    %308 = vmatpush1.msra.mxu0 0.0
    %309 = vmatprep.subr.mxu0 0.0
    %310 = vmatpush1.msra.mxu0 0.0
    %311 = vmatprep.subr.mxu0 0.0
    %312 = vmatpush1.msra.mxu0 0.0
    %313 = vmatprep.subr.mxu0 0.0
    %314 = vmatpush1.msra.mxu0 0.0
    %315 = vmatprep.subr.mxu0 0.0
    %316 = vmatpush1.msra.mxu0 0.0
    %317 = vmatprep.subr.mxu0 0.0
    %318 = vmatpush1.msra.mxu0 0.0
    %319 = vmatprep.subr.mxu0 0.0
    %320 = vmatpush1.msra.mxu0 0.0
    %321 = vmatprep.subr.mxu0 0.0
    %322 = vmatpush1.msra.mxu0 0.0
    %323 = vmatprep.subr.mxu0 0.0
    %324 = vmatpush1.msra.mxu0 0.0
    %325 = vmatprep.subr.mxu0 0.0
    %326 = vmatpush1.msra.mxu0 0.0
    %327 = vmatprep.subr.mxu0 0.0
    %328 = vmatpush1.msra.mxu0 0.0
    %329 = vmatprep.subr.mxu0 0.0
    %330 = vmatpush1.msra.mxu0 0.0
    %331 = vmatprep.subr.mxu0 0.0
    %332 = vmatpush1.msra.mxu0 0.0
    %333 = vmatprep.subr.mxu0 0.0
    %334 = vmatpush1.msra.mxu0 0.0
    %335 = vmatprep.subr.mxu0 0.0
    %336 = vmatpush1.msra.mxu0 0.0
    %337 = vmatprep.subr.mxu0 0.0
    %338 = vmatpush1.msra.mxu0 0.0
    %339 = vmatprep.subr.mxu0 0.0
    %340 = vmatpush1.msra.mxu0 0.0
    %341 = vmatprep.subr.mxu0 0.0
    %342 = vmatpush1.msra.mxu0 0.0
    %343 = vmatprep.subr.mxu0 0.0
    %344 = vmatpush1.msra.mxu0 0.0
    %345 = vmatprep.subr.mxu0 0.0
    %346 = vmatpush1.msra.mxu0 0.0
    %347 = vmatprep.subr.mxu0 0.0
    %348 = vmatpush1.msra.mxu0 0.0
    %349 = vmatprep.subr.mxu0 0.0
    %350 = vmatpush1.msra.mxu0 0.0
    %351 = vmatprep.subr.mxu0 0.0
    %352 = vmatpush1.msra.mxu0 0.0
    %353 = vmatprep.subr.mxu0 0.0
    %354 = vmatpush1.msra.mxu0 0.0
    %355 = vmatprep.subr.mxu0 0.0
    %356 = vmatpush1.msra.mxu0 0.0
    %357 = vmatprep.subr.mxu0 0.0
    %358 = vmatpush1.msra.mxu0 0.0
    %359 = vmatprep.mubr.f32.mxu0 0.0
    %360 = vmatmul.mubr.f32.gmra.mrb[0].mxu0 %v293
    %v361 = vpop.f32.mrb[0].mxu0
    %v362 = vadd.f32 0.0, %v361
    %v363 = vpop.f32.mrb[0].mxu0
    %364 = vdwg.mxu0
    %v366 = vrot.slane %v362, 2
    %v368 = vadd.f32 %v119, %v366
    %v369 = vtanh.pop %v368
    %v371 = vrot.slane %v369, 6
    %v372 = vsel %vm130, %v371, 0
    %374 = vmatprep.subr.mxu0 0.0
    %375 = vmatpush1.msra.mxu0 %v127
    %376 = vmatprep.subr.mxu0 0.0
    %377 = vmatpush1.msra.mxu0 %v135
    %378 = vmatprep.subr.mxu0 0.0
    %379 = vmatpush1.msra.mxu0 0.0
    %380 = vmatprep.subr.mxu0 0.0
    %381 = vmatpush1.msra.mxu0 0.0
    %382 = vmatprep.subr.mxu0 0.0
    %383 = vmatpush1.msra.mxu0 0.0
    %384 = vmatprep.subr.mxu0 0.0
    %385 = vmatpush1.msra.mxu0 0.0
    %386 = vmatprep.subr.mxu0 0.0
    %387 = vmatpush1.msra.mxu0 0.0
    %388 = vmatprep.subr.mxu0 0.0
    %389 = vmatpush1.msra.mxu0 0.0
    %390 = vmatprep.subr.mxu0 0.0
    %391 = vmatpush1.msra.mxu0 0.0
    %392 = vmatprep.subr.mxu0 0.0
    %393 = vmatpush1.msra.mxu0 0.0
    %394 = vmatprep.subr.mxu0 0.0
    %395 = vmatpush1.msra.mxu0 0.0
    %396 = vmatprep.subr.mxu0 0.0
    %397 = vmatpush1.msra.mxu0 0.0
    %398 = vmatprep.subr.mxu0 0.0
    %399 = vmatpush1.msra.mxu0 0.0
    %400 = vmatprep.subr.mxu0 0.0
    %401 = vmatpush1.msra.mxu0 0.0
    %402 = vmatprep.subr.mxu0 0.0
    %403 = vmatpush1.msra.mxu0 0.0
    %404 = vmatprep.subr.mxu0 0.0
    %405 = vmatpush1.msra.mxu0 0.0
    %406 = vmatprep.subr.mxu0 0.0
    %407 = vmatpush1.msra.mxu0 0.0
    %408 = vmatprep.subr.mxu0 0.0
    %409 = vmatpush1.msra.mxu0 0.0
    %410 = vmatprep.subr.mxu0 0.0
    %411 = vmatpush1.msra.mxu0 0.0
    %412 = vmatprep.subr.mxu0 0.0
    %413 = vmatpush1.msra.mxu0 0.0
    %414 = vmatprep.subr.mxu0 0.0
    %415 = vmatpush1.msra.mxu0 0.0
    %416 = vmatprep.subr.mxu0 0.0
    %417 = vmatpush1.msra.mxu0 0.0
    %418 = vmatprep.subr.mxu0 0.0
    %419 = vmatpush1.msra.mxu0 0.0
    %420 = vmatprep.subr.mxu0 0.0
    %421 = vmatpush1.msra.mxu0 0.0
    %422 = vmatprep.subr.mxu0 0.0
    %423 = vmatpush1.msra.mxu0 0.0
    %424 = vmatprep.subr.mxu0 0.0
    %425 = vmatpush1.msra.mxu0 0.0
    %426 = vmatprep.subr.mxu0 0.0
    %427 = vmatpush1.msra.mxu0 0.0
    %428 = vmatprep.subr.mxu0 0.0
    %429 = vmatpush1.msra.mxu0 0.0
    %430 = vmatprep.subr.mxu0 0.0
    %431 = vmatpush1.msra.mxu0 0.0
    %432 = vmatprep.subr.mxu0 0.0
    %433 = vmatpush1.msra.mxu0 0.0
    %434 = vmatprep.subr.mxu0 0.0
    %435 = vmatpush1.msra.mxu0 0.0
    %436 = vmatprep.subr.mxu0 0.0
    %437 = vmatpush1.msra.mxu0 0.0
    %438 = vmatprep.mubr.f32.mxu0 0.0
    %439 = vmatmul.mubr.f32.gmra.mrb[0].mxu0 %v372
    %v440 = vpop.f32.mrb[0].mxu0
    %v441 = vadd.f32 0.0, %v440
    %v442 = vpop.f32.mrb[0].mxu0
    %443 = vdwg.mxu0
    %v444 = vadd.f32 %v124, %v441
    %v445 = vtanh.pop %v444
    %v447 = vsel %vm130, %v445, 0
    %449 = vmatprep.subr.mxu0 0.0
    %450 = vmatpush1.msra.mxu0 %v127
    %451 = vmatprep.subr.mxu0 0.0
    %452 = vmatpush1.msra.mxu0 %v135
    %453 = vmatprep.subr.mxu0 0.0
    %454 = vmatpush1.msra.mxu0 0.0
    %455 = vmatprep.subr.mxu0 0.0
    %456 = vmatpush1.msra.mxu0 0.0
    %457 = vmatprep.subr.mxu0 0.0
    %458 = vmatpush1.msra.mxu0 0.0
    %459 = vmatprep.subr.mxu0 0.0
    %460 = vmatpush1.msra.mxu0 0.0
    %461 = vmatprep.subr.mxu0 0.0
    %462 = vmatpush1.msra.mxu0 0.0
    %463 = vmatprep.subr.mxu0 0.0
    %464 = vmatpush1.msra.mxu0 0.0
    %465 = vmatprep.subr.mxu0 0.0
    %466 = vmatpush1.msra.mxu0 0.0
    %467 = vmatprep.subr.mxu0 0.0
    %468 = vmatpush1.msra.mxu0 0.0
    %469 = vmatprep.subr.mxu0 0.0
    %470 = vmatpush1.msra.mxu0 0.0
    %471 = vmatprep.subr.mxu0 0.0
    %472 = vmatpush1.msra.mxu0 0.0
    %473 = vmatprep.subr.mxu0 0.0
    %474 = vmatpush1.msra.mxu0 0.0
    %475 = vmatprep.subr.mxu0 0.0
    %476 = vmatpush1.msra.mxu0 0.0
    %477 = vmatprep.subr.mxu0 0.0
    %478 = vmatpush1.msra.mxu0 0.0
    %479 = vmatprep.subr.mxu0 0.0
    %480 = vmatpush1.msra.mxu0 0.0
    %481 = vmatprep.subr.mxu0 0.0
    %482 = vmatpush1.msra.mxu0 0.0
    %483 = vmatprep.subr.mxu0 0.0
    %484 = vmatpush1.msra.mxu0 0.0
    %485 = vmatprep.subr.mxu0 0.0
    %486 = vmatpush1.msra.mxu0 0.0
    %487 = vmatprep.subr.mxu0 0.0
    %488 = vmatpush1.msra.mxu0 0.0
    %489 = vmatprep.subr.mxu0 0.0
    %490 = vmatpush1.msra.mxu0 0.0
    %491 = vmatprep.subr.mxu0 0.0
    %492 = vmatpush1.msra.mxu0 0.0
    %493 = vmatprep.subr.mxu0 0.0
    %494 = vmatpush1.msra.mxu0 0.0
    %495 = vmatprep.subr.mxu0 0.0
    %496 = vmatpush1.msra.mxu0 0.0
    %497 = vmatprep.subr.mxu0 0.0
    %498 = vmatpush1.msra.mxu0 0.0
    %499 = vmatprep.subr.mxu0 0.0
    %500 = vmatpush1.msra.mxu0 0.0
    %501 = vmatprep.subr.mxu0 0.0
    %502 = vmatpush1.msra.mxu0 0.0
    %503 = vmatprep.subr.mxu0 0.0
    %504 = vmatpush1.msra.mxu0 0.0
    %505 = vmatprep.subr.mxu0 0.0
    %506 = vmatpush1.msra.mxu0 0.0
    %507 = vmatprep.subr.mxu0 0.0
    %508 = vmatpush1.msra.mxu0 0.0
    %509 = vmatprep.subr.mxu0 0.0
    %510 = vmatpush1.msra.mxu0 0.0
    %511 = vmatprep.subr.mxu0 0.0
    %512 = vmatpush1.msra.mxu0 0.0
    %513 = vmatprep.mubr.f32.mxu0 0.0
    %514 = vmatmul.mubr.f32.gmra.mrb[0].mxu0 %v447
    %v515 = vpop.f32.mrb[0].mxu0
    %v516 = vadd.f32 0.0, %v515
    %v517 = vpop.f32.mrb[0].mxu0
    %518 = vdwg.mxu0
    %v520 = vrot.slane %v516, 6
    %v522 = vadd.f32 %v124, %v520
    %v523 = vtanh.pop %v522
    %v525 = vrot.slane %v523, 2
    %v526 = vsel %vm130, %v525, 0
    %528 = vmatprep.subr.mxu0 0.0
    %529 = vmatpush1.msra.mxu0 %v127
    %530 = vmatprep.subr.mxu0 0.0
    %531 = vmatpush1.msra.mxu0 %v135
    %532 = vmatprep.subr.mxu0 0.0
    %533 = vmatpush1.msra.mxu0 0.0
    %534 = vmatprep.subr.mxu0 0.0
    %535 = vmatpush1.msra.mxu0 0.0
    %536 = vmatprep.subr.mxu0 0.0
    %537 = vmatpush1.msra.mxu0 0.0
    %538 = vmatprep.subr.mxu0 0.0
    %539 = vmatpush1.msra.mxu0 0.0
    %540 = vmatprep.subr.mxu0 0.0
    %541 = vmatpush1.msra.mxu0 0.0
    %542 = vmatprep.subr.mxu0 0.0
    %543 = vmatpush1.msra.mxu0 0.0
    %544 = vmatprep.subr.mxu0 0.0
    %545 = vmatpush1.msra.mxu0 0.0
    %546 = vmatprep.subr.mxu0 0.0
    %547 = vmatpush1.msra.mxu0 0.0
    %548 = vmatprep.subr.mxu0 0.0
    %549 = vmatpush1.msra.mxu0 0.0
    %550 = vmatprep.subr.mxu0 0.0
    %551 = vmatpush1.msra.mxu0 0.0
    %552 = vmatprep.subr.mxu0 0.0
    %553 = vmatpush1.msra.mxu0 0.0
    %554 = vmatprep.subr.mxu0 0.0
    %555 = vmatpush1.msra.mxu0 0.0
    %556 = vmatprep.subr.mxu0 0.0
    %557 = vmatpush1.msra.mxu0 0.0
    %558 = vmatprep.subr.mxu0 0.0
    %559 = vmatpush1.msra.mxu0 0.0
    %560 = vmatprep.subr.mxu0 0.0
    %561 = vmatpush1.msra.mxu0 0.0
    %562 = vmatprep.subr.mxu0 0.0
    %563 = vmatpush1.msra.mxu0 0.0
    %564 = vmatprep.subr.mxu0 0.0
    %565 = vmatpush1.msra.mxu0 0.0
    %566 = vmatprep.subr.mxu0 0.0
    %567 = vmatpush1.msra.mxu0 0.0
    %568 = vmatprep.subr.mxu0 0.0
    %569 = vmatpush1.msra.mxu0 0.0
    %570 = vmatprep.subr.mxu0 0.0
    %571 = vmatpush1.msra.mxu0 0.0
    %572 = vmatprep.subr.mxu0 0.0
    %573 = vmatpush1.msra.mxu0 0.0
    %574 = vmatprep.subr.mxu0 0.0
    %575 = vmatpush1.msra.mxu0 0.0
    %576 = vmatprep.subr.mxu0 0.0
    %577 = vmatpush1.msra.mxu0 0.0
    %578 = vmatprep.subr.mxu0 0.0
    %579 = vmatpush1.msra.mxu0 0.0
    %580 = vmatprep.subr.mxu0 0.0
    %581 = vmatpush1.msra.mxu0 0.0
    %582 = vmatprep.subr.mxu0 0.0
    %583 = vmatpush1.msra.mxu0 0.0
    %584 = vmatprep.subr.mxu0 0.0
    %585 = vmatpush1.msra.mxu0 0.0
    %586 = vmatprep.subr.mxu0 0.0
    %587 = vmatpush1.msra.mxu0 0.0
    %588 = vmatprep.subr.mxu0 0.0
    %589 = vmatpush1.msra.mxu0 0.0
    %590 = vmatprep.subr.mxu0 0.0
    %591 = vmatpush1.msra.mxu0 0.0
    %592 = vmatprep.mubr.f32.mxu0 0.0
    %593 = vmatmul.mubr.f32.gmra.mrb[0].mxu0 %v526
    %v594 = vpop.f32.mrb[0].mxu0
    %v595 = vadd.f32 0.0, %v594
    %v596 = vpop.f32.mrb[0].mxu0
    %597 = vdwg.mxu0
    %v599 = vrot.slane %v595, 4
    %v601 = vadd.f32 %v124, %v599
    %v602 = vtanh.pop %v601
    %v604 = vrot.slane %v602, 4
    %v605 = vsel %vm130, %v604, 0
    %607 = vmatprep.subr.mxu0 0.0
    %608 = vmatpush1.msra.mxu0 %v127
    %609 = vmatprep.subr.mxu0 0.0
    %610 = vmatpush1.msra.mxu0 %v135
    %611 = vmatprep.subr.mxu0 0.0
    %612 = vmatpush1.msra.mxu0 0.0
    %613 = vmatprep.subr.mxu0 0.0
    %614 = vmatpush1.msra.mxu0 0.0
    %615 = vmatprep.subr.mxu0 0.0
    %616 = vmatpush1.msra.mxu0 0.0
    %617 = vmatprep.subr.mxu0 0.0
    %618 = vmatpush1.msra.mxu0 0.0
    %619 = vmatprep.subr.mxu0 0.0
    %620 = vmatpush1.msra.mxu0 0.0
    %621 = vmatprep.subr.mxu0 0.0
    %622 = vmatpush1.msra.mxu0 0.0
    %623 = vmatprep.subr.mxu0 0.0
    %624 = vmatpush1.msra.mxu0 0.0
    %625 = vmatprep.subr.mxu0 0.0
    %626 = vmatpush1.msra.mxu0 0.0
    %627 = vmatprep.subr.mxu0 0.0
    %628 = vmatpush1.msra.mxu0 0.0
    %629 = vmatprep.subr.mxu0 0.0
    %630 = vmatpush1.msra.mxu0 0.0
    %631 = vmatprep.subr.mxu0 0.0
    %632 = vmatpush1.msra.mxu0 0.0
    %633 = vmatprep.subr.mxu0 0.0
    %634 = vmatpush1.msra.mxu0 0.0
    %635 = vmatprep.subr.mxu0 0.0
    %636 = vmatpush1.msra.mxu0 0.0
    %637 = vmatprep.subr.mxu0 0.0
    %638 = vmatpush1.msra.mxu0 0.0
    %639 = vmatprep.subr.mxu0 0.0
    %640 = vmatpush1.msra.mxu0 0.0
    %641 = vmatprep.subr.mxu0 0.0
    %642 = vmatpush1.msra.mxu0 0.0
    %643 = vmatprep.subr.mxu0 0.0
    %644 = vmatpush1.msra.mxu0 0.0
    %645 = vmatprep.subr.mxu0 0.0
    %646 = vmatpush1.msra.mxu0 0.0
    %647 = vmatprep.subr.mxu0 0.0
    %648 = vmatpush1.msra.mxu0 0.0
    %649 = vmatprep.subr.mxu0 0.0
    %650 = vmatpush1.msra.mxu0 0.0
    %651 = vmatprep.subr.mxu0 0.0
    %652 = vmatpush1.msra.mxu0 0.0
    %653 = vmatprep.subr.mxu0 0.0
    %654 = vmatpush1.msra.mxu0 0.0
    %655 = vmatprep.subr.mxu0 0.0
    %656 = vmatpush1.msra.mxu0 0.0
    %657 = vmatprep.subr.mxu0 0.0
    %658 = vmatpush1.msra.mxu0 0.0
    %659 = vmatprep.subr.mxu0 0.0
    %660 = vmatpush1.msra.mxu0 0.0
    %661 = vmatprep.subr.mxu0 0.0
    %662 = vmatpush1.msra.mxu0 0.0
    %663 = vmatprep.subr.mxu0 0.0
    %664 = vmatpush1.msra.mxu0 0.0
    %665 = vmatprep.subr.mxu0 0.0
    %666 = vmatpush1.msra.mxu0 0.0
    %667 = vmatprep.subr.mxu0 0.0
    %668 = vmatpush1.msra.mxu0 0.0
    %669 = vmatprep.subr.mxu0 0.0
    %670 = vmatpush1.msra.mxu0 0.0
    %671 = vmatprep.mubr.f32.mxu0 0.0
    %672 = vmatmul.mubr.f32.gmra.mrb[0].mxu0 %v605
    %v673 = vpop.f32.mrb[0].mxu0
    %v674 = vadd.f32 0.0, %v673
    %v675 = vpop.f32.mrb[0].mxu0
    %676 = vdwg.mxu0
    %v678 = vrot.slane %v674, 2
    %v680 = vadd.f32 %v124, %v678
    %v681 = vtanh.pop %v680
    %v682 = vmax.f32 %v681, 0.0
    %v683 = vld [vmem:[%s3] sm:$0xff]
    %v684 = vld [vmem:[%s3 + $0x8] sm:$0x3]
    %v685 = vld [vmem:[%s4] sm:$0x1]
    %v687 = vlaneseq
    %v688 = vshrl.u32 %v687, 7
    %v689 = vsub.s32 0, %v688
    %v690 = vrot.slane %v685, %v689
    %v693 = vrot.slane %v682, 6
    %v694 = vsel %vm130, %v693, 0
    %v697 = vsel %vm48, %v684, 0
    %699 = vmatprep.subr.mxu0 0.0
    %700 = vmatpush1.msra.mxu0 %v683
    %701 = vmatprep.subr.mxu0 0.0
    %702 = vmatpush1.msra.mxu0 %v697
    %703 = vmatprep.subr.mxu0 0.0
    %704 = vmatpush1.msra.mxu0 0.0
    %705 = vmatprep.subr.mxu0 0.0
    %706 = vmatpush1.msra.mxu0 0.0
    %707 = vmatprep.subr.mxu0 0.0
    %708 = vmatpush1.msra.mxu0 0.0
    %709 = vmatprep.subr.mxu0 0.0
    %710 = vmatpush1.msra.mxu0 0.0
    %711 = vmatprep.subr.mxu0 0.0
    %712 = vmatpush1.msra.mxu0 0.0
    %713 = vmatprep.subr.mxu0 0.0
    %714 = vmatpush1.msra.mxu0 0.0
    %715 = vmatprep.subr.mxu0 0.0
    %716 = vmatpush1.msra.mxu0 0.0
    %717 = vmatprep.subr.mxu0 0.0
    %718 = vmatpush1.msra.mxu0 0.0
    %719 = vmatprep.subr.mxu0 0.0
    %720 = vmatpush1.msra.mxu0 0.0
    %721 = vmatprep.subr.mxu0 0.0
    %722 = vmatpush1.msra.mxu0 0.0
    %723 = vmatprep.subr.mxu0 0.0
    %724 = vmatpush1.msra.mxu0 0.0
    %725 = vmatprep.subr.mxu0 0.0
    %726 = vmatpush1.msra.mxu0 0.0
    %727 = vmatprep.subr.mxu0 0.0
    %728 = vmatpush1.msra.mxu0 0.0
    %729 = vmatprep.subr.mxu0 0.0
    %730 = vmatpush1.msra.mxu0 0.0
    %731 = vmatprep.subr.mxu0 0.0
    %732 = vmatpush1.msra.mxu0 0.0
    %733 = vmatprep.subr.mxu0 0.0
    %734 = vmatpush1.msra.mxu0 0.0
    %735 = vmatprep.subr.mxu0 0.0
    %736 = vmatpush1.msra.mxu0 0.0
    %737 = vmatprep.subr.mxu0 0.0
    %738 = vmatpush1.msra.mxu0 0.0
    %739 = vmatprep.subr.mxu0 0.0
    %740 = vmatpush1.msra.mxu0 0.0
    %741 = vmatprep.subr.mxu0 0.0
    %742 = vmatpush1.msra.mxu0 0.0
    %743 = vmatprep.subr.mxu0 0.0
    %744 = vmatpush1.msra.mxu0 0.0
    %745 = vmatprep.subr.mxu0 0.0
    %746 = vmatpush1.msra.mxu0 0.0
    %747 = vmatprep.subr.mxu0 0.0
    %748 = vmatpush1.msra.mxu0 0.0
    %749 = vmatprep.subr.mxu0 0.0
    %750 = vmatpush1.msra.mxu0 0.0
    %751 = vmatprep.subr.mxu0 0.0
    %752 = vmatpush1.msra.mxu0 0.0
    %753 = vmatprep.subr.mxu0 0.0
    %754 = vmatpush1.msra.mxu0 0.0
    %755 = vmatprep.subr.mxu0 0.0
    %756 = vmatpush1.msra.mxu0 0.0
    %757 = vmatprep.subr.mxu0 0.0
    %758 = vmatpush1.msra.mxu0 0.0
    %759 = vmatprep.subr.mxu0 0.0
    %760 = vmatpush1.msra.mxu0 0.0
    %761 = vmatprep.subr.mxu0 0.0
    %762 = vmatpush1.msra.mxu0 0.0
    %763 = vmatprep.mubr.f32.mxu0 0.0
    %764 = vmatmul.mubr.f32.gmra.mrb[0].mxu0 %v694
    %v765 = vpop.f32.mrb[0].mxu0
    %v766 = vadd.f32 %v690, %v765
    %v767 = vpop.f32.mrb[0].mxu0
    %768 = vdwg.mxu0
    %vm769 = vcmask 41984
    %770 = vst.msk [vmem:[#allocation2] sm:$0x3] %vm769, %v766
    // Predicated region
    $region22: #{model_forward.1} parent=1 // pred_check
      _
    $region23: #{model_forward.1} parent=1 // pred_check_branch
      %772 = sbr.rel (0) target = $region25
    $region24: #{model_forward.1} parent=1 // pred_region
      %s774 = ssub.s32 32, 32
      %775 = vsyncadd [#allocation3], %s774
      %s777 = sshll.u32 [#allocation2], 4
      %s778 = int_to_ptr.vmem [resolvable:$true] %s777
      %780 = dma.vmem_to_hbm [thread:$0]  %s778, 32, %s5, [#allocation3]
    $region25: #{model_forward.1} parent=1 // pred_fallthru
      _
    // Predicated region
    $region26: #{model_forward.1} parent=1 // pred_check
      _
    $region27: #{model_forward.1} parent=1 // pred_check_branch
      %782 = sbr.rel (0) target = $region29
    $region28: #{model_forward.1} parent=1 // pred_region
      %783 = dma.done [#allocation3], 32
    $region29: #{model_forward.1} parent=1 // pred_fallthru
      _
    %784 = vsyncpa [#allocation3], 1

</llo_original>
